<compile_context>
chip_gen: v7x
topology: tpu7x:2x2x1
jax: 0.10.0
libtpu: 0.0.40
codegen_flags: <defaults>
</compile_context>

<pallas_src>
import functools

import jax
import jax.numpy as jnp
from jax import lax
from jax.experimental import pallas as pl
from jax.experimental.pallas import tpu as pltpu


_COLS = 512              # lane-dense tile width (multiple of 128)
_MAX_BLOCK_ROWS = 2048   # 2048 * 512 * 4 B = 4 MiB per f32 input block


def _round_up(x, m):
    return (x + m - 1) // m * m


def _sublane_multiple(dtype):
    # rows per vreg: 8 for 4-byte, 16 for 2-byte, 32 for 1-byte dtypes.
    return 8 * max(1, 4 // jnp.dtype(dtype).itemsize)


# --- rotation convention of apply_2d_rotation() (Gidaris RotNet) ---
#  90:  flip_upside_down(spatial_transpose(x))
# 180:  flip_left_right(flip_upside_down(x))
# 270:  spatial_transpose(flip_upside_down(x))
def _rot90(x):
    return jnp.flip(jnp.swapaxes(x, -2, -1), axis=-2)


def _rot180(x):
    return jnp.flip(x, axis=(-2, -1))


def _rot270(x):
    return jnp.swapaxes(jnp.flip(x, axis=-2), -2, -1)


def _rotation_gather_table(H, W):
    """(4, H*W) int32 table: rot_r(x).flat[p] == x.flat[table[r, p]]."""
    base = jnp.arange(H * W, dtype=jnp.int32).reshape(H, W)
    return jnp.stack(
        [base.reshape(-1),
         _rot90(base).reshape(-1),
         _rot180(base).reshape(-1),
         _rot270(base).reshape(-1)],
        axis=0,
    )


def _partial_loss_kernel(a_ref, b_ref, l2_ref, kl_ref, *,
                         block_rows, cols, valid_rows, mask_tail):
    # a_ref: rotated-hp tile, b_ref: hp_rot tile, both (block_rows, cols).
    a = a_ref[...].astype(jnp.float32)
    b = b_ref[...].astype(jnp.float32)

    if mask_tail:
        # The last block is ragged (no padded copy was made): rows at or past
        # `valid_rows - j*block_rows` hold garbage.  Replace BOTH operands
        # with 1.0 before any math so those rows contribute exactly 0.
        j = pl.program_id(0)
        row = lax.broadcasted_iota(jnp.int32, (block_rows, cols), 0)
        valid = row < (valid_rows - j * block_rows)
        a = jnp.where(valid, a, 1.0)
        b = jnp.where(valid, b, 1.0)

    d = a - b
    l2 = d * d
    # KL integrand as a log-difference: keeps the divide off the VALU path and
    # puts both logs on the EUP slot.  Semantics match
    # a * log(a / clamp(b, 1e-9)) on the positive-heatmap domain.
    kl = a * (jnp.log(a) - jnp.log(jnp.maximum(b, 1e-9)))

    # Reduce only across sublane-groups of 8 (plain VPU adds between vregs).
    # Keeping (8, cols) partials avoids a cross-sublane XLU collapse and makes
    # the store a full unmasked lane-dense tile; the final tiny reduction is a
    # jnp.sum in the wrapper, so the grid axis stays fully parallel.
    l2_ref[0] = jnp.sum(l2.reshape(block_rows // 8, 8, cols), axis=0)
    kl_ref[0] = jnp.sum(kl.reshape(block_rows // 8, 8, cols), axis=0)


@jax.jit
def equivariance_constraint_loss(hp, hp_rot, label_rot):
    """JAX/Pallas port of EquivarianceConstraintLoss.forward.

    hp, hp_rot: (N, C, H, W) heatmaps; label_rot: (N,) int in [0, 4).
    The per-rotation boolean-mask loop of the PyTorch code is equivalent to a
    per-sample rotation selection followed by global sums.
    """
    N, C, H, W = hp.shape
    assert H == W, "spatial rotation requires square feature maps"
    HW = H * W
    T = N * C * HW

    # --- glue 1: per-sample rotation as a single gather (hp read once) ---
    table = _rotation_gather_table(H, W)                          # (4, HW)
    idx = jnp.take(table, label_rot.astype(jnp.int32), axis=0)    # (N, HW)
    idx = jnp.broadcast_to(idx[:, None, :], (N, C, HW))
    hp_applied = jnp.take_along_axis(hp.reshape(N, C, HW), idx, axis=-1)
    # TODO(synk): stretch goal — fold the rotation gather into the Pallas
    # kernel (scalar-prefetch label_rot + in-kernel lane gather) to avoid
    # materializing hp_applied at all.

    # --- glue 2: lane-dense 2-D slabs with (near-)zero padding ---
    rows = pl.cdiv(T, _COLS)
    sub = _sublane_multiple(hp.dtype)
    num_blocks = pl.cdiv(rows, _MAX_BLOCK_ROWS)
    block_rows = _round_up(pl.cdiv(rows, num_blocks), sub)
    mask_tail = (rows % block_rows) != 0

    flat_pad = rows * _COLS - T   # < _COLS; only when T isn't lane-aligned

    def _prep(x):
        flat = x.reshape(-1)
        if flat_pad:
            # Pad value 1.0 contributes 0 to both the L2 and KL terms.
            flat = jnp.pad(flat, (0, flat_pad), constant_values=1.0)
        return flat.reshape(rows, _COLS)

    a2 = _prep(hp_applied)   # original dtype; the f32 upcast happens on the VPU
    b2 = _prep(hp_rot)

    itemsize = jnp.dtype(hp.dtype).itemsize
    cost = pl.CostEstimate(
        flops=8 * T,
        transcendentals=2 * T,
        bytes_accessed=2 * rows * _COLS * itemsize
        + num_blocks * 2 * 8 * _COLS * 4,
    )

    kernel = functools.partial(
        _partial_loss_kernel,
        block_rows=block_rows, cols=_COLS, valid_rows=rows, mask_tail=mask_tail)

    l2_parts, kl_parts = pl.pallas_call(
        kernel,
        out_shape=(
            jax.ShapeDtypeStruct((num_blocks, 8, _COLS), jnp.float32),
            jax.ShapeDtypeStruct((num_blocks, 8, _COLS), jnp.float32),
        ),
        grid_spec=pltpu.PrefetchScalarGridSpec(
            num_scalar_prefetch=0,
            grid=(num_blocks,),
            in_specs=[
                pl.BlockSpec((block_rows, _COLS), lambda j: (j, 0)),
                pl.BlockSpec((block_rows, _COLS), lambda j: (j, 0)),
            ],
            out_specs=[
                pl.BlockSpec((1, 8, _COLS), lambda j: (j, 0, 0)),
                pl.BlockSpec((1, 8, _COLS), lambda j: (j, 0, 0)),
            ],
        ),
        compiler_params=pltpu.CompilerParams(
            # Independent per-block partials -> fully parallel grid.  (On v7x,
            # if a trace shows one TC doing all blocks, this is the knob to
            # flip to pltpu.CORE_PARALLEL.)
            dimension_semantics=("parallel",),
            vmem_limit_bytes=32 * 1024 * 1024,
        ),
        cost_estimate=cost,
    )(a2, b2)

    loss_l2 = jnp.sum(l2_parts) / (N * C * H * W)   # / hp.nelement()
    loss_kl = jnp.sum(kl_parts) / N                 # / hp.size(0)
    return loss_kl * 0.4 + loss_l2 * 0.6


def _reference_loss(hp, hp_rot, label_rot):
    # Straight JAX transcription of the PyTorch forward, for checking only.
    rots = jnp.stack([hp, _rot90(hp), _rot180(hp), _rot270(hp)], axis=0)
    hp_applied = rots[label_rot, jnp.arange(hp.shape[0])]
    a = hp_applied.astype(jnp.float32)
    b = hp_rot.astype(jnp.float32)
    loss_l2 = jnp.sum((a - b) ** 2) / hp.size
    loss_kl = jnp.sum(a * jnp.log(a / jnp.maximum(b, 1e-9))) / hp.shape[0]
    return loss_kl * 0.4 + loss_l2 * 0.6


if __name__ == "__main__":
    key = jax.random.PRNGKey(0)

    def _make_case(k, N, C, H, W):
        k1, k2, k3 = jax.random.split(k, 3)
        # Heatmap-like positive inputs (softmax over spatial) so the KL log is
        # finite, matching the intended use on softmax heatmaps.
        hp = jax.nn.softmax(
            jax.random.normal(k1, (N, C, H * W)), axis=-1).reshape(N, C, H, W)
        hp_rot = jax.nn.softmax(
            jax.random.normal(k2, (N, C, H * W)), axis=-1).reshape(N, C, H, W)
        label_rot = jax.random.randint(k3, (N,), 0, 4)
        return hp, hp_rot, label_rot

    k_a, k_b = jax.random.split(key)

    # Case 1: lane/block aligned -> pure reshapes, no padding, no masking.
    hp, hp_rot, label_rot = _make_case(k_a, 8, 4, 16, 16)
    out = equivariance_constraint_loss(hp, hp_rot, label_rot)
    jax.block_until_ready(out)
    ref = _reference_loss(hp, hp_rot, label_rot)
    assert bool(jnp.isfinite(out)), out
    assert abs(float(out) - float(ref)) <= 1e-4 + 1e-3 * abs(float(ref)), (out, ref)

    # Case 2: ragged sizes -> tiny element-tail pad + in-kernel row-mask path.
    hp, hp_rot, label_rot = _make_case(k_b, 3, 3, 16, 16)
    out = equivariance_constraint_loss(hp, hp_rot, label_rot)
    jax.block_until_ready(out)
    ref = _reference_loss(hp, hp_rot, label_rot)
    assert bool(jnp.isfinite(out)), out
    assert abs(float(out) - float(ref)) <= 1e-4 + 1e-3 * abs(float(ref)), (out, ref)

    print("KERNEL_OK")
</pallas_src>

<mosaic_0001>
module attributes {stable_mosaic.version = 11 : i64} {
  func.func private @main(%arg0: i32) attributes {dimension_semantics = [#tpu.dimension_semantics<core_parallel>], iteration_bounds = array<i64: 2>, tpu.core_type = #tpu.core_type<sc_scalar_subcore>, window_params = []} {
    return
  }
}

module attributes {stable_mosaic.version = 11 : i64} {
  func.func private @main(%arg0: i32) attributes {dimension_semantics = [#tpu.dimension_semantics<core_parallel>], iteration_bounds = array<i64: 2>, tpu.core_type = #tpu.core_type<sc_scalar_subcore>, window_params = []} {
    return
  }
}

module attributes {stable_mosaic.version = 11 : i64} {
  func.func @_partial_loss_kernel(%arg0: i32, %arg1: memref<16x512xf32, #tpu.memory_space<vmem>>, %arg2: memref<16x512xf32, #tpu.memory_space<vmem>>, %arg3: memref<1x8x512xf32, #tpu.memory_space<vmem>>, %arg4: memref<1x8x512xf32, #tpu.memory_space<vmem>>) attributes {dimension_semantics = [#tpu.dimension_semantics<parallel>], iteration_bounds = array<i64: 1>, scalar_prefetch = 0 : i64, scratch_operands = 0 : i64, tpu.core_type = #tpu.core_type<tc>, window_params = [{transform_indices = @transform_0, window_bounds = array<i64: 16, 512>}, {transform_indices = @transform_1, window_bounds = array<i64: 16, 512>}, {transform_indices = @transform_2, window_bounds = array<i64: 1, 8, 512>}, {transform_indices = @transform_3, window_bounds = array<i64: 1, 8, 512>}]} {
    %c0 = arith.constant 0 : index
    %c0_0 = arith.constant 0 : index
    %0 = vector.load %arg1[%c0, %c0_0] : memref<16x512xf32, #tpu.memory_space<vmem>>, vector<16x512xf32>
    %c0_1 = arith.constant 0 : index
    %c0_2 = arith.constant 0 : index
    %1 = vector.load %arg2[%c0_1, %c0_2] : memref<16x512xf32, #tpu.memory_space<vmem>>, vector<16x512xf32>
    %2 = arith.subf %0, %1 : vector<16x512xf32>
    %3 = arith.mulf %2, %2 : vector<16x512xf32>
    %4 = math.log %0 : vector<16x512xf32>
    %cst = arith.constant 9.99999971E-10 : f32
    %5 = vector.broadcast %cst : f32 to vector<16x512xf32>
    %6 = arith.maximumf %1, %5 : vector<16x512xf32>
    %7 = math.log %6 : vector<16x512xf32>
    %8 = arith.subf %4, %7 : vector<16x512xf32>
    %9 = arith.mulf %0, %8 : vector<16x512xf32>
    %10 = vector.shape_cast %3 : vector<16x512xf32> to vector<2x8x512xf32>
    %cst_3 = arith.constant dense<0.000000e+00> : vector<8x512xf32>
    %11 = vector.multi_reduction <add>, %10, %cst_3 [0] : vector<2x8x512xf32> to vector<8x512xf32>
    %c0_4 = arith.constant 0 : index
    %c0_5 = arith.constant 0 : index
    %c0_6 = arith.constant 0 : index
    %12 = vector.load %arg3[%c0_4, %c0_5, %c0_6] : memref<1x8x512xf32, #tpu.memory_space<vmem>>, vector<1x8x512xf32>
    %13 = vector.shape_cast %12 : vector<1x8x512xf32> to vector<8x512xf32>
    %14 = vector.shape_cast %11 : vector<8x512xf32> to vector<1x8x512xf32>
    tpu.vector_store %arg3[%c0_4, %c0_5, %c0_6], %14 {strides = array<i32>} : memref<1x8x512xf32, #tpu.memory_space<vmem>>, vector<1x8x512xf32>,
    %15 = vector.shape_cast %9 : vector<16x512xf32> to vector<2x8x512xf32>
    %cst_7 = arith.constant dense<0.000000e+00> : vector<8x512xf32>
    %16 = vector.multi_reduction <add>, %15, %cst_7 [0] : vector<2x8x512xf32> to vector<8x512xf32>
    %c0_8 = arith.constant 0 : index
    %c0_9 = arith.constant 0 : index
    %c0_10 = arith.constant 0 : index
    %17 = vector.load %arg4[%c0_8, %c0_9, %c0_10] : memref<1x8x512xf32, #tpu.memory_space<vmem>>, vector<1x8x512xf32>
    %18 = vector.shape_cast %17 : vector<1x8x512xf32> to vector<8x512xf32>
    %19 = vector.shape_cast %16 : vector<8x512xf32> to vector<1x8x512xf32>
    tpu.vector_store %arg4[%c0_8, %c0_9, %c0_10], %19 {strides = array<i32>} : memref<1x8x512xf32, #tpu.memory_space<vmem>>, vector<1x8x512xf32>,
    return
  }
  func.func @transform_0(%arg0: i32) -> (i32, i32) {
    %c0_i32 = arith.constant 0 : i32
    %c0_i32_0 = arith.constant 0 : i32
    return %arg0, %c0_i32 : i32, i32
  }
  func.func @transform_1(%arg0: i32) -> (i32, i32) {
    %c0_i32 = arith.constant 0 : i32
    %c0_i32_0 = arith.constant 0 : i32
    return %arg0, %c0_i32 : i32, i32
  }
  func.func @transform_2(%arg0: i32) -> (i32, i32, i32) {
    %c0_i32 = arith.constant 0 : i32
    %c0_i32_0 = arith.constant 0 : i32
    %c0_i32_1 = arith.constant 0 : i32
    return %arg0, %c0_i32, %c0_i32_0 : i32, i32, i32
  }
  func.func @transform_3(%arg0: i32) -> (i32, i32, i32) {
    %c0_i32 = arith.constant 0 : i32
    %c0_i32_0 = arith.constant 0 : i32
    %c0_i32_1 = arith.constant 0 : i32
    return %arg0, %c0_i32, %c0_i32_0 : i32, i32, i32
  }
}

</mosaic_0001>

<llo_original>
// kernel: equivariance_constraint_loss.1
$region0: #{equivariance_constraint_loss.1}
  #allocation0 [shape = 'u32[]', space=smem, size = 0x4, offset = 0x4, fixed_abs, tag = 'smem constant byte address 0x4 - core index']
  #allocation1 [shape = 'u32[144,128]{1,0:T(1,128)}', space=vmem, size = 0x12000, scoped, tag = 'internal scratch']
  %s0 = inlined_call_operand.vmem [shape: f32[16,512], index: 0, kind: input, shape index: {}]
  %s1 = inlined_call_operand.vmem [shape: f32[16,512], index: 1, kind: input, shape index: {}]
  %s2 = inlined_call_operand.vmem [shape: f32[1,8,512], index: 2, kind: output, shape index: {0}]
  %s3 = inlined_call_operand.vmem [shape: f32[1,8,512], index: 3, kind: output, shape index: {1}]
  %4 = xla_tuple %s2, %s3
  %s5 = sld [smem:[#allocation0]]
  $region26: #{equivariance_constraint_loss.1} parent=0
    _
  %s7 = ssub.s32 1, %s5
  %s8 = scalar_select 0, %s7, %s5
  // Predicated region
  $region2: #{equivariance_constraint_loss.1} parent=0 // pred_check
    _
  $region3: #{equivariance_constraint_loss.1} parent=0 // pred_check_branch
    %10 = sbr.rel (0) target = $region5
  $region4: #{equivariance_constraint_loss.1} parent=0 // pred_region
    _
  $region5: #{equivariance_constraint_loss.1} parent=0 // pred_fallthru
    _
  // Predicated region
  $region6: #{equivariance_constraint_loss.1} parent=0 // pred_check
    _
  $region7: #{equivariance_constraint_loss.1} parent=0 // pred_check_branch
    %12 = sbr.rel (0) target = $region9
  $region8: #{equivariance_constraint_loss.1} parent=0 // pred_region
    _
  $region9: #{equivariance_constraint_loss.1} parent=0 // pred_fallthru
    _
  %v13 = vld [vmem:[%s0] sm:$0xff]
  %v14 = vld [vmem:[%s0 + $0x8] sm:$0xff]
  %v15 = vld [vmem:[%s0 + $0x10] sm:$0xff]
  %v16 = vld [vmem:[%s0 + $0x18] sm:$0xff]
  %v17 = vld [vmem:[%s0 + $0x20] sm:$0xff]
  %v18 = vld [vmem:[%s0 + $0x28] sm:$0xff]
  %v19 = vld [vmem:[%s0 + $0x30] sm:$0xff]
  %v20 = vld [vmem:[%s0 + $0x38] sm:$0xff]
  %v21 = vld [vmem:[%s1] sm:$0xff]
  %v22 = vld [vmem:[%s1 + $0x8] sm:$0xff]
  %v23 = vld [vmem:[%s1 + $0x10] sm:$0xff]
  %v24 = vld [vmem:[%s1 + $0x18] sm:$0xff]
  %v25 = vld [vmem:[%s1 + $0x20] sm:$0xff]
  %v26 = vld [vmem:[%s1 + $0x28] sm:$0xff]
  %v27 = vld [vmem:[%s1 + $0x30] sm:$0xff]
  %v28 = vld [vmem:[%s1 + $0x38] sm:$0xff]
  %v29 = vsub.f32 %v13, %v21
  %v30 = vsub.f32 %v14, %v22
  %v31 = vsub.f32 %v15, %v23
  %v32 = vsub.f32 %v16, %v24
  %v33 = vsub.f32 %v17, %v25
  %v34 = vsub.f32 %v18, %v26
  %v35 = vsub.f32 %v19, %v27
  %v36 = vsub.f32 %v20, %v28
  %v37 = vmul.f32 %v29, %v29
  %v38 = vmul.f32 %v30, %v30
  %v39 = vmul.f32 %v31, %v31
  %v40 = vmul.f32 %v32, %v32
  %v41 = vmul.f32 %v33, %v33
  %v42 = vmul.f32 %v34, %v34
  %v43 = vmul.f32 %v35, %v35
  %v44 = vmul.f32 %v36, %v36
  %v45 = vlog2.pop %v13
  %v46 = vmul.f32 %v45, 0.6931472
  %v47 = vlog2.pop %v14
  %v48 = vmul.f32 %v47, 0.6931472
  %v49 = vlog2.pop %v15
  %v50 = vmul.f32 %v49, 0.6931472
  %v51 = vlog2.pop %v16
  %v52 = vmul.f32 %v51, 0.6931472
  %v53 = vlog2.pop %v17
  %v54 = vmul.f32 %v53, 0.6931472
  %v55 = vlog2.pop %v18
  %v56 = vmul.f32 %v55, 0.6931472
  %v57 = vlog2.pop %v19
  %v58 = vmul.f32 %v57, 0.6931472
  %v59 = vlog2.pop %v20
  %v60 = vmul.f32 %v59, 0.6931472
  %v61 = vmax.f32 %v21, 1e-09
  %v62 = vmax.f32 %v22, 1e-09
  %v63 = vmax.f32 %v23, 1e-09
  %v64 = vmax.f32 %v24, 1e-09
  %v65 = vmax.f32 %v25, 1e-09
  %v66 = vmax.f32 %v26, 1e-09
  %v67 = vmax.f32 %v27, 1e-09
  %v68 = vmax.f32 %v28, 1e-09
  %v69 = vlog2.pop %v61
  %v70 = vmul.f32 %v69, 0.6931472
  %v71 = vlog2.pop %v62
  %v72 = vmul.f32 %v71, 0.6931472
  %v73 = vlog2.pop %v63
  %v74 = vmul.f32 %v73, 0.6931472
  %v75 = vlog2.pop %v64
  %v76 = vmul.f32 %v75, 0.6931472
  %v77 = vlog2.pop %v65
  %v78 = vmul.f32 %v77, 0.6931472
  %v79 = vlog2.pop %v66
  %v80 = vmul.f32 %v79, 0.6931472
  %v81 = vlog2.pop %v67
  %v82 = vmul.f32 %v81, 0.6931472
  %v83 = vlog2.pop %v68
  %v84 = vmul.f32 %v83, 0.6931472
  %v85 = vsub.f32 %v46, %v70
  %v86 = vsub.f32 %v48, %v72
  %v87 = vsub.f32 %v50, %v74
  %v88 = vsub.f32 %v52, %v76
  %v89 = vsub.f32 %v54, %v78
  %v90 = vsub.f32 %v56, %v80
  %v91 = vsub.f32 %v58, %v82
  %v92 = vsub.f32 %v60, %v84
  %v93 = vmul.f32 %v13, %v85
  %v94 = vmul.f32 %v14, %v86
  %v95 = vmul.f32 %v15, %v87
  %v96 = vmul.f32 %v16, %v88
  %v97 = vmul.f32 %v17, %v89
  %v98 = vmul.f32 %v18, %v90
  %v99 = vmul.f32 %v19, %v91
  %v100 = vmul.f32 %v20, %v92
  %v101 = vadd.f32 %v37, %v41
  %v102 = vadd.f32 %v38, %v42
  %v103 = vadd.f32 %v39, %v43
  %v104 = vadd.f32 %v40, %v44
  %105 = vst [vmem:[%s2] sm:$0xff] %v101
  %106 = vst [vmem:[%s2 + $0x8] sm:$0xff] %v102
  %107 = vst [vmem:[%s2 + $0x10] sm:$0xff] %v103
  %108 = vst [vmem:[%s2 + $0x18] sm:$0xff] %v104
  %v109 = vadd.f32 %v93, %v97
  %v110 = vadd.f32 %v94, %v98
  %v111 = vadd.f32 %v95, %v99
  %v112 = vadd.f32 %v96, %v100
  %113 = vst [vmem:[%s3] sm:$0xff] %v109
  %114 = vst [vmem:[%s3 + $0x8] sm:$0xff] %v110
  %115 = vst [vmem:[%s3 + $0x10] sm:$0xff] %v111
  %116 = vst [vmem:[%s3 + $0x18] sm:$0xff] %v112
  // Predicated region
  $region10: #{equivariance_constraint_loss.1} parent=0 // pred_check
    _
  $region11: #{equivariance_constraint_loss.1} parent=0 // pred_check_branch
    %118 = sbr.rel (0) target = $region13
  $region12: #{equivariance_constraint_loss.1} parent=0 // pred_region
    _
  $region13: #{equivariance_constraint_loss.1} parent=0 // pred_fallthru
    _
  // Predicated region
  $region14: #{equivariance_constraint_loss.1} parent=0 // pred_check
    _
  $region15: #{equivariance_constraint_loss.1} parent=0 // pred_check_branch
    %120 = sbr.rel (0) target = $region17
  $region16: #{equivariance_constraint_loss.1} parent=0 // pred_region
    _
  $region17: #{equivariance_constraint_loss.1} parent=0 // pred_fallthru
    _
  // Predicated region
  $region18: #{equivariance_constraint_loss.1} parent=0 // pred_check
    _
  $region19: #{equivariance_constraint_loss.1} parent=0 // pred_check_branch
    %122 = sbr.rel (0) target = $region21
  $region20: #{equivariance_constraint_loss.1} parent=0 // pred_region
    _
  $region21: #{equivariance_constraint_loss.1} parent=0 // pred_fallthru
    _
  // Predicated region
  $region22: #{equivariance_constraint_loss.1} parent=0 // pred_check
    _
  $region23: #{equivariance_constraint_loss.1} parent=0 // pred_check_branch
    %124 = sbr.rel (0) target = $region25
  $region24: #{equivariance_constraint_loss.1} parent=0 // pred_region
    _
  $region25: #{equivariance_constraint_loss.1} parent=0 // pred_fallthru
    _

</llo_original>
